<compile_context>
chip_gen: v7x
topology: tpu7x:2x2x1
jax: 0.10.0
libtpu: 0.0.40
codegen_flags: <defaults>
</compile_context>

<pallas_src>
import jax
import jax.numpy as jnp
from jax.experimental import pallas as pl
from jax.experimental.pallas import tpu as pltpu

_LANES = 1024          # lane-dense last dim (multiple of 128)
_MAX_TILE_ROWS = 512   # 512 x 1024 x 4B = 2 MiB per f32 block


def _copy_kernel(x_ref, o_ref):
    # Forward pass is exactly the identity: o = x.
    o_ref[...] = x_ref[...]


@jax.jit
def arw_app_map_forward(x):
    """Pallas implementation of arw_app_map.forward (identity pass-through).

    x: any-shaped array (module uses (B, N, D)). Returns an array equal to x.
    """
    orig_shape = x.shape
    total = x.size

    # Tile sizing: rows of a lane-dense (rows, 1024) slab. Keep tile_rows a
    # multiple of 8 (sublane) and cap at 512 rows so the double-buffered
    # in+out working set stays under every generation's scoped-VMEM default.
    rows_needed = pl.cdiv(total, _LANES)
    tile_rows = min(_MAX_TILE_ROWS, max(8, ((rows_needed + 7) // 8) * 8))
    rows = ((rows_needed + tile_rows - 1) // tile_rows) * tile_rows
    padded = rows * _LANES

    x_flat = jnp.ravel(x)
    if padded != total:
        x_flat = jnp.pad(x_flat, (0, padded - total))
    x2d = x_flat.reshape(rows, _LANES)

    out2d = pl.pallas_call(
        _copy_kernel,
        out_shape=jax.ShapeDtypeStruct((rows, _LANES), x.dtype),
        grid=(rows // tile_rows,),
        in_specs=[pl.BlockSpec((tile_rows, _LANES), lambda i: (i, 0))],
        out_specs=pl.BlockSpec((tile_rows, _LANES), lambda i: (i, 0)),
        input_output_aliases={0: 0},  # donate the (temporary) 2D slab buffer
        compiler_params=pltpu.CompilerParams(
            dimension_semantics=("parallel",),  # v7x: 2 TCs split the rows
        ),
    )(x2d)

    return out2d.reshape(-1)[:total].reshape(orig_shape)


# TODO(synk): decode()'s point-cloud construction (torch.rand -> stack -> sort
# -> repeat) is dead code — its result is never returned — so it is
# intentionally not reproduced in the kernel.


if __name__ == "__main__":
    key = jax.random.PRNGKey(0)
    # (batch=2, num_points=8, point_dim=3) — consistent with decode's use of
    # x.shape[1] as num_points.
    x = jax.random.normal(key, (2, 8, 3), dtype=jnp.float32)

    out = arw_app_map_forward(x)
    out = jax.block_until_ready(out)

    assert out.shape == x.shape and out.dtype == x.dtype
    assert bool(jnp.all(out == x))
    print("KERNEL_OK")
</pallas_src>

<mosaic_0001>
module attributes {stable_mosaic.version = 11 : i64} {
  func.func @_copy_kernel(%arg0: i32, %arg1: memref<8x1024xf32, #tpu.memory_space<vmem>>, %arg2: memref<8x1024xf32, #tpu.memory_space<vmem>>) attributes {dimension_semantics = [#tpu.dimension_semantics<parallel>], iteration_bounds = array<i64: 1>, scalar_prefetch = 0 : i64, scratch_operands = 0 : i64, tpu.core_type = #tpu.core_type<tc>, window_params = [{transform_indices = @transform_0, window_bounds = array<i64: 8, 1024>}, {transform_indices = @transform_1, window_bounds = array<i64: 8, 1024>}]} {
    %c0 = arith.constant 0 : index
    %c0_0 = arith.constant 0 : index
    %0 = vector.load %arg1[%c0, %c0_0] : memref<8x1024xf32, #tpu.memory_space<vmem>>, vector<8x1024xf32>
    %c0_1 = arith.constant 0 : index
    %c0_2 = arith.constant 0 : index
    %1 = vector.load %arg2[%c0_1, %c0_2] : memref<8x1024xf32, #tpu.memory_space<vmem>>, vector<8x1024xf32>
    tpu.vector_store %arg2[%c0_1, %c0_2], %0 {strides = array<i32>} : memref<8x1024xf32, #tpu.memory_space<vmem>>, vector<8x1024xf32>,
    return
  }
  func.func @transform_0(%arg0: i32) -> (i32, i32) {
    %c0_i32 = arith.constant 0 : i32
    %c0_i32_0 = arith.constant 0 : i32
    return %arg0, %c0_i32 : i32, i32
  }
  func.func @transform_1(%arg0: i32) -> (i32, i32) {
    %c0_i32 = arith.constant 0 : i32
    %c0_i32_0 = arith.constant 0 : i32
    return %arg0, %c0_i32 : i32, i32
  }
}

</mosaic_0001>

<llo_original>
// kernel: arw_app_map_forward.1
$region0: #{arw_app_map_forward.1}
  #allocation0 [shape = 'u32[]', space=smem, size = 0x4, offset = 0x4, fixed_abs, tag = 'smem constant byte address 0x4 - core index']
  #allocation1 [shape = 'u32[144,128]{1,0:T(1,128)}', space=vmem, size = 0x12000, scoped, tag = 'internal scratch']
  %s0 = inlined_call_operand.vmem [shape: f32[8,1024], index: 0, kind: input, shape index: {}, may-alias: {0,1}]
  %s1 = inlined_call_operand.vmem [shape: f32[8,1024], index: 1, kind: output, shape index: {}, may-alias: {0,1}]
  %s2 = sld [smem:[#allocation0]]
  $region14: #{arw_app_map_forward.1} parent=0
    _
  %s4 = ssub.s32 1, %s2
  %s5 = scalar_select 0, %s4, %s2
  // Predicated region
  $region2: #{arw_app_map_forward.1} parent=0 // pred_check
    _
  $region3: #{arw_app_map_forward.1} parent=0 // pred_check_branch
    %7 = sbr.rel (0) target = $region5
  $region4: #{arw_app_map_forward.1} parent=0 // pred_region
    _
  $region5: #{arw_app_map_forward.1} parent=0 // pred_fallthru
    _
  %v8 = vld [vmem:[%s0] sm:$0xff]
  %v9 = vld [vmem:[%s0 + $0x8] sm:$0xff]
  %v10 = vld [vmem:[%s0 + $0x10] sm:$0xff]
  %v11 = vld [vmem:[%s0 + $0x18] sm:$0xff]
  %v12 = vld [vmem:[%s0 + $0x20] sm:$0xff]
  %v13 = vld [vmem:[%s0 + $0x28] sm:$0xff]
  %v14 = vld [vmem:[%s0 + $0x30] sm:$0xff]
  %v15 = vld [vmem:[%s0 + $0x38] sm:$0xff]
  %16 = vst [vmem:[%s1] sm:$0xff] %v8
  %17 = vst [vmem:[%s1 + $0x8] sm:$0xff] %v9
  %18 = vst [vmem:[%s1 + $0x10] sm:$0xff] %v10
  %19 = vst [vmem:[%s1 + $0x18] sm:$0xff] %v11
  %20 = vst [vmem:[%s1 + $0x20] sm:$0xff] %v12
  %21 = vst [vmem:[%s1 + $0x28] sm:$0xff] %v13
  %22 = vst [vmem:[%s1 + $0x30] sm:$0xff] %v14
  %23 = vst [vmem:[%s1 + $0x38] sm:$0xff] %v15
  // Predicated region
  $region6: #{arw_app_map_forward.1} parent=0 // pred_check
    _
  $region7: #{arw_app_map_forward.1} parent=0 // pred_check_branch
    %25 = sbr.rel (0) target = $region9
  $region8: #{arw_app_map_forward.1} parent=0 // pred_region
    _
  $region9: #{arw_app_map_forward.1} parent=0 // pred_fallthru
    _
  // Predicated region
  $region10: #{arw_app_map_forward.1} parent=0 // pred_check
    _
  $region11: #{arw_app_map_forward.1} parent=0 // pred_check_branch
    %27 = sbr.rel (0) target = $region13
  $region12: #{arw_app_map_forward.1} parent=0 // pred_region
    _
  $region13: #{arw_app_map_forward.1} parent=0 // pred_fallthru
    _

</llo_original>
